<compile_context>
chip_gen: v6e
topology: v6e:2x2x1
jax: 0.10.0
libtpu: 0.0.40
codegen_flags: <defaults>
</compile_context>

<pallas_src>
import functools
import math

import jax
import jax.numpy as jnp
from jax import lax
from jax.experimental import pallas as pl
from jax.experimental.pallas import tpu as pltpu


def _mod(x, n):
    """x % n for a static positive python int n (bitwise AND when n is a power of 2)."""
    if (n & (n - 1)) == 0:
        return jnp.bitwise_and(x, n - 1)
    return x % n


def _multihead_conv_kernel(x_ref, wb_ref, bb_ref, wh_ref, bh_ref, o_ref, *, H, W):
    """Fused 3x3 conv (padding=1) + bias + ReLU + all 1x1 heads on one lane-dense tile.

    x_ref : (Cin, tn)        streamed input, tn = b_tile*H*W (whole images per tile)
    wb_ref: (9, Cmid, Cin)   resident backbone taps, tap t = kh*3 + kw  (f32)
    bb_ref: (Cmid, 1)        backbone bias (f32)
    wh_ref: (O_total, Cmid)  fused head weights, heads concatenated on rows (f32)
    bh_ref: (O_total, 1)     fused head biases (f32)
    o_ref : (O_total, tn)
    """
    HW = H * W
    tn = x_ref.shape[1]
    cmid = wb_ref.shape[1]

    # Single HBM->VMEM read of the raw input; everything below is on-chip.
    x = x_ref[...].astype(jnp.float32)                         # (Cin, tn)

    # Static per-lane position decomposition (tiles hold whole images).
    lane = lax.broadcasted_iota(jnp.int32, (1, tn), 1)
    p = _mod(lane, HW)                                         # position within image
    w = _mod(p, W)                                             # column within row

    acc = jnp.zeros((cmid, tn), jnp.float32)
    for t in range(9):                                         # unrolled: 9 conv taps
        dh, dw = t // 3 - 1, t % 3 - 1
        delta = dh * W + dw
        # tap value at position m is x[m + delta]; roll runs on the (idle) XLU slot.
        xt = x if delta == 0 else pltpu.roll(x, shift=(-delta) % tn, axis=1)
        # Zero taps that fall outside the image (conv padding=1).  Lanes that
        # wrapped around in the roll are a subset of these, so they are masked too.
        cond = None
        if dh == -1:
            cond = p >= W
        elif dh == 1:
            cond = p < (H - 1) * W
        if dw == -1:
            c2 = w >= 1
            cond = c2 if cond is None else (cond & c2)
        elif dw == 1:
            c2 = w <= W - 2
            cond = c2 if cond is None else (cond & c2)
        if cond is not None:
            xt = jnp.where(cond, xt, 0.0)
        acc = acc + jnp.dot(wb_ref[t], xt, preferred_element_type=jnp.float32)

    feat = jnp.maximum(acc + bb_ref[...], 0.0)                 # (Cmid, tn), f32 (no re-quant)

    # Both heads fused: one matmul, one wide lane-dense store.
    out = jnp.dot(wh_ref[...], feat, preferred_element_type=jnp.float32)
    out = out + bh_ref[...]
    o_ref[...] = out.astype(o_ref.dtype)


def multi_output_net(x_nchw, params, *, tn=2048,
                     compute_dtype=jnp.bfloat16, out_dtype=jnp.float32):
    """Forward pass of MultiOutputNet (mode='independent').

    x_nchw: (B, Cin, H, W) float32
    params: dict of PyTorch-layout Conv2d weights.
    tn:     target lane-tile width (positions per grid step); tuned 2048-8192.
    compute_dtype: dtype of the streamed activations (bf16 default: halves HBM read).
    Returns a tuple of NCHW float32 (out_dtype) outputs, one per head.
    """
    B, Cin, H, W = x_nchw.shape
    HW = H * W

    Cmid = params["backbone_w"].shape[0]
    O1 = params["head1_w"].shape[0]
    O2 = params["head2_w"].shape[0]
    O_total = O1 + O2

    # ---- lane tile selection: whole images per grid step -------------------------
    # k_align: minimum image count so the lane tile is a multiple of 128 (required
    # whenever there is more than one grid step).
    k_align = 128 // math.gcd(HW, 128)
    b_tile = max(1, min(B, tn // HW))                 # target images per step
    if B >= 2:
        # keep >= 2 "parallel" grid steps so both v7x TensorCores get work
        b_tile = min(b_tile, -(-B // 2))
    b_tile = max(k_align, (b_tile // k_align) * k_align)
    if b_tile >= B:
        b_tile = B                                    # single full-width step
    B_pad = -(-B // b_tile) * b_tile
    num_steps = B_pad // b_tile
    tn_eff = b_tile * HW
    M = B * HW
    M_pad = B_pad * HW

    # ---- lane-dense input slab (Cin, M): NO im2col expansion in HBM ---------------
    xt = jnp.transpose(x_nchw, (1, 0, 2, 3)).reshape(Cin, M).astype(compute_dtype)
    if M_pad != M:
        xt = jnp.pad(xt, ((0, 0), (0, M_pad - M)))

    # ---- tiny resident weights, kept in f32 (no double quantization) --------------
    wb = jnp.transpose(params["backbone_w"], (2, 3, 0, 1)).reshape(9, Cmid, Cin)
    wb = wb.astype(jnp.float32)                                   # taps t = kh*3 + kw
    bb = params["backbone_b"].reshape(Cmid, 1).astype(jnp.float32)
    wh = jnp.concatenate([params["head1_w"].reshape(O1, Cmid),
                          params["head2_w"].reshape(O2, Cmid)],
                         axis=0).astype(jnp.float32)
    bh = jnp.concatenate([params["head1_b"], params["head2_b"]]
                         ).reshape(O_total, 1).astype(jnp.float32)

    kernel = functools.partial(_multihead_conv_kernel, H=H, W=W)

    flops = 2 * M_pad * (9 * Cin * Cmid + Cmid * O_total)
    bytes_accessed = (M_pad * Cin * jnp.dtype(compute_dtype).itemsize
                      + M_pad * O_total * jnp.dtype(out_dtype).itemsize
                      + (wb.size + wh.size + Cmid + O_total) * 4)

    out_flat = pl.pallas_call(
        kernel,
        out_shape=jax.ShapeDtypeStruct((O_total, M_pad), out_dtype),
        grid_spec=pl.GridSpec(
            grid=(num_steps,),
            in_specs=[
                pl.BlockSpec((Cin, tn_eff), lambda i: (0, i)),        # streamed input
                pl.BlockSpec((9, Cmid, Cin), lambda i: (0, 0, 0)),    # resident weights
                pl.BlockSpec((Cmid, 1), lambda i: (0, 0)),            # resident bias
                pl.BlockSpec((O_total, Cmid), lambda i: (0, 0)),      # resident fused heads
                pl.BlockSpec((O_total, 1), lambda i: (0, 0)),         # resident head bias
            ],
            out_specs=pl.BlockSpec((O_total, tn_eff), lambda i: (0, i)),
        ),
        compiler_params=pltpu.CompilerParams(
            dimension_semantics=("parallel",)),
        cost_estimate=pl.CostEstimate(flops=int(flops), transcendentals=0,
                                      bytes_accessed=int(bytes_accessed)),
    )(xt, wb, bb, wh, bh)

    # ---- back to the module's NCHW tuple-of-heads contract ------------------------
    out_flat = out_flat[:, :M]                       # drop padded-batch lanes (if any)
    out = out_flat.reshape(O_total, B, H, W).transpose(1, 0, 2, 3)
    return out[:, :O1], out[:, O1:O1 + O2]


def _reference(x_nchw, params):
    """Pure-JAX reference (NCHW conv) for correctness checking."""
    dn = lax.conv_dimension_numbers(x_nchw.shape, params["backbone_w"].shape,
                                    ("NCHW", "OIHW", "NCHW"))
    feat = lax.conv_general_dilated(x_nchw, params["backbone_w"], (1, 1),
                                    ((1, 1), (1, 1)), dimension_numbers=dn)
    feat = jnp.maximum(feat + params["backbone_b"][None, :, None, None], 0.0)

    def head(w, b):
        dnh = lax.conv_dimension_numbers(feat.shape, w.shape, ("NCHW", "OIHW", "NCHW"))
        y = lax.conv_general_dilated(feat, w, (1, 1), "VALID", dimension_numbers=dnh)
        return y + b[None, :, None, None]

    return (head(params["head1_w"], params["head1_b"]),
            head(params["head2_w"], params["head2_b"]))


if __name__ == "__main__":
    key = jax.random.PRNGKey(0)
    kx, k1, k2, k3, k4, k5, k6 = jax.random.split(key, 7)

    B, Cin, H, W = 2, 4, 16, 16
    Cmid, O1, O2 = 8, 3, 5

    x = jax.random.normal(kx, (B, Cin, H, W), dtype=jnp.float32)

    params = {
        "backbone_w": 0.1 * jax.random.normal(k1, (Cmid, Cin, 3, 3), jnp.float32),
        "backbone_b": 0.1 * jax.random.normal(k2, (Cmid,), jnp.float32),
        "head1_w":    0.1 * jax.random.normal(k3, (O1, Cmid, 1, 1), jnp.float32),
        "head1_b":    0.1 * jax.random.normal(k4, (O1,), jnp.float32),
        "head2_w":    0.1 * jax.random.normal(k5, (O2, Cmid, 1, 1), jnp.float32),
        "head2_b":    0.1 * jax.random.normal(k6, (O2,), jnp.float32),
    }

    refs = _reference(x, params)

    # f32 streamed operands: exact in-kernel tap/mask math vs XLA conv reference.
    fwd_f32 = jax.jit(functools.partial(multi_output_net, compute_dtype=jnp.float32))
    outs_f32 = jax.block_until_ready(fwd_f32(x, params))
    for o, r in zip(outs_f32, refs):
        assert o.shape == r.shape
        assert jnp.allclose(o, r, atol=1e-4, rtol=1e-4)

    # default path: bf16 streamed activations (HBM halved), f32 accumulation.
    fwd = jax.jit(multi_output_net)
    outs = jax.block_until_ready(fwd(x, params))
    for o, r in zip(outs, refs):
        assert o.shape == r.shape
        assert jnp.allclose(o, r, atol=5e-2, rtol=5e-2)

    print("KERNEL_OK")
</pallas_src>

<mosaic_0001>
module attributes {stable_mosaic.version = 11 : i64} {
  func.func @_multihead_conv_kernel(%arg0: i32, %arg1: memref<4x256xf32, #tpu.memory_space<vmem>>, %arg2: memref<9x8x4xf32, #tpu.memory_space<vmem>>, %arg3: memref<8x1xf32, #tpu.memory_space<vmem>>, %arg4: memref<8x8xf32, #tpu.memory_space<vmem>>, %arg5: memref<8x1xf32, #tpu.memory_space<vmem>>, %arg6: memref<8x256xf32, #tpu.memory_space<vmem>>) attributes {dimension_semantics = [#tpu.dimension_semantics<parallel>], iteration_bounds = array<i64: 2>, scalar_prefetch = 0 : i64, scratch_operands = 0 : i64, tpu.core_type = #tpu.core_type<tc>, window_params = [{transform_indices = @transform_0, window_bounds = array<i64: 4, 256>}, {pipeline_mode = #tpu.pipeline_mode<synchronous>, transform_indices = @transform_1, window_bounds = array<i64: 9, 8, 4>}, {pipeline_mode = #tpu.pipeline_mode<synchronous>, transform_indices = @transform_2, window_bounds = array<i64: 8, 1>}, {pipeline_mode = #tpu.pipeline_mode<synchronous>, transform_indices = @transform_3, window_bounds = array<i64: 8, 8>}, {pipeline_mode = #tpu.pipeline_mode<synchronous>, transform_indices = @transform_4, window_bounds = array<i64: 8, 1>}, {transform_indices = @transform_5, window_bounds = array<i64: 8, 256>}]} {
    %c0 = arith.constant 0 : index
    %c0_0 = arith.constant 0 : index
    %0 = vector.load %arg1[%c0, %c0_0] : memref<4x256xf32, #tpu.memory_space<vmem>>, vector<4x256xf32>
    %1 = tpu.iota {dimensions = array<i32: 1>} : vector<1x256xi32>
    %c255_i32 = arith.constant 255 : i32
    %2 = vector.broadcast %c255_i32 : i32 to vector<1x256xi32>
    %3 = arith.andi %1, %2 : vector<1x256xi32>
    %c15_i32 = arith.constant 15 : i32
    %4 = vector.broadcast %c15_i32 : i32 to vector<1x256xi32>
    %5 = arith.andi %3, %4 : vector<1x256xi32>
    %cst = arith.constant 0.000000e+00 : f32
    %6 = vector.broadcast %cst : f32 to vector<8x256xf32>
    %c17_i32 = arith.constant 17 : i32
    %7 = tpu.dynamic_rotate %0 by %c17_i32 dim 1 : vector<4x256xf32>, i32 -> vector<4x256xf32>
    %c16_i32 = arith.constant 16 : i32
    %8 = vector.broadcast %c16_i32 : i32 to vector<1x256xi32>
    %9 = arith.cmpi sge, %3, %8 : vector<1x256xi32>
    %c1_i32 = arith.constant 1 : i32
    %10 = vector.broadcast %c1_i32 : i32 to vector<1x256xi32>
    %11 = arith.cmpi sge, %5, %10 : vector<1x256xi32>
    %12 = arith.andi %9, %11 : vector<1x256xi1>
    %cst_1 = arith.constant 0.000000e+00 : f32
    %13 = vector.shape_cast %12 : vector<1x256xi1> to vector<1x256xi1>
    %14 = vector.broadcast %13 : vector<1x256xi1> to vector<4x256xi1>
    %15 = vector.broadcast %cst_1 : f32 to vector<4x256xf32>
    %16 = arith.select %14, %7, %15 : vector<4x256xi1>, vector<4x256xf32>
    %c0_2 = arith.constant 0 : index
    %c0_3 = arith.constant 0 : index
    %c0_4 = arith.constant 0 : index
    %17 = vector.load %arg2[%c0_2, %c0_3, %c0_4] : memref<9x8x4xf32, #tpu.memory_space<vmem>>, vector<1x8x4xf32>
    %18 = vector.shape_cast %17 : vector<1x8x4xf32> to vector<8x4xf32>
    %cst_5 = arith.constant dense<0.000000e+00> : vector<8x256xf32>
    %19 = tpu.matmul %18, %16, %cst_5 {dimension_numbers = #tpu.dot_dimension_numbers<[1], [0], [0], [1], [0, 0, 1, 1], [], []>} : vector<8x4xf32>, vector<4x256xf32>, vector<8x256xf32> -> vector<8x256xf32>
    %20 = arith.addf %6, %19 : vector<8x256xf32>
    %c16_i32_6 = arith.constant 16 : i32
    %21 = tpu.dynamic_rotate %0 by %c16_i32_6 dim 1 : vector<4x256xf32>, i32 -> vector<4x256xf32>
    %c16_i32_7 = arith.constant 16 : i32
    %22 = vector.broadcast %c16_i32_7 : i32 to vector<1x256xi32>
    %23 = arith.cmpi sge, %3, %22 : vector<1x256xi32>
    %cst_8 = arith.constant 0.000000e+00 : f32
    %24 = vector.shape_cast %23 : vector<1x256xi1> to vector<1x256xi1>
    %25 = vector.broadcast %24 : vector<1x256xi1> to vector<4x256xi1>
    %26 = vector.broadcast %cst_8 : f32 to vector<4x256xf32>
    %27 = arith.select %25, %21, %26 : vector<4x256xi1>, vector<4x256xf32>
    %c1 = arith.constant 1 : index
    %c0_9 = arith.constant 0 : index
    %c0_10 = arith.constant 0 : index
    %28 = vector.load %arg2[%c1, %c0_9, %c0_10] : memref<9x8x4xf32, #tpu.memory_space<vmem>>, vector<1x8x4xf32>
    %29 = vector.shape_cast %28 : vector<1x8x4xf32> to vector<8x4xf32>
    %cst_11 = arith.constant dense<0.000000e+00> : vector<8x256xf32>
    %30 = tpu.matmul %29, %27, %cst_11 {dimension_numbers = #tpu.dot_dimension_numbers<[1], [0], [0], [1], [0, 0, 1, 1], [], []>} : vector<8x4xf32>, vector<4x256xf32>, vector<8x256xf32> -> vector<8x256xf32>
    %31 = arith.addf %20, %30 : vector<8x256xf32>
    %c15_i32_12 = arith.constant 15 : i32
    %32 = tpu.dynamic_rotate %0 by %c15_i32_12 dim 1 : vector<4x256xf32>, i32 -> vector<4x256xf32>
    %c16_i32_13 = arith.constant 16 : i32
    %33 = vector.broadcast %c16_i32_13 : i32 to vector<1x256xi32>
    %34 = arith.cmpi sge, %3, %33 : vector<1x256xi32>
    %c14_i32 = arith.constant 14 : i32
    %35 = vector.broadcast %c14_i32 : i32 to vector<1x256xi32>
    %36 = arith.cmpi sle, %5, %35 : vector<1x256xi32>
    %37 = arith.andi %34, %36 : vector<1x256xi1>
    %cst_14 = arith.constant 0.000000e+00 : f32
    %38 = vector.shape_cast %37 : vector<1x256xi1> to vector<1x256xi1>
    %39 = vector.broadcast %38 : vector<1x256xi1> to vector<4x256xi1>
    %40 = vector.broadcast %cst_14 : f32 to vector<4x256xf32>
    %41 = arith.select %39, %32, %40 : vector<4x256xi1>, vector<4x256xf32>
    %c2 = arith.constant 2 : index
    %c0_15 = arith.constant 0 : index
    %c0_16 = arith.constant 0 : index
    %42 = vector.load %arg2[%c2, %c0_15, %c0_16] : memref<9x8x4xf32, #tpu.memory_space<vmem>>, vector<1x8x4xf32>
    %43 = vector.shape_cast %42 : vector<1x8x4xf32> to vector<8x4xf32>
    %cst_17 = arith.constant dense<0.000000e+00> : vector<8x256xf32>
    %44 = tpu.matmul %43, %41, %cst_17 {dimension_numbers = #tpu.dot_dimension_numbers<[1], [0], [0], [1], [0, 0, 1, 1], [], []>} : vector<8x4xf32>, vector<4x256xf32>, vector<8x256xf32> -> vector<8x256xf32>
    %45 = arith.addf %31, %44 : vector<8x256xf32>
    %c1_i32_18 = arith.constant 1 : i32
    %46 = tpu.dynamic_rotate %0 by %c1_i32_18 dim 1 : vector<4x256xf32>, i32 -> vector<4x256xf32>
    %c1_i32_19 = arith.constant 1 : i32
    %47 = vector.broadcast %c1_i32_19 : i32 to vector<1x256xi32>
    %48 = arith.cmpi sge, %5, %47 : vector<1x256xi32>
    %cst_20 = arith.constant 0.000000e+00 : f32
    %49 = vector.shape_cast %48 : vector<1x256xi1> to vector<1x256xi1>
    %50 = vector.broadcast %49 : vector<1x256xi1> to vector<4x256xi1>
    %51 = vector.broadcast %cst_20 : f32 to vector<4x256xf32>
    %52 = arith.select %50, %46, %51 : vector<4x256xi1>, vector<4x256xf32>
    %c3 = arith.constant 3 : index
    %c0_21 = arith.constant 0 : index
    %c0_22 = arith.constant 0 : index
    %53 = vector.load %arg2[%c3, %c0_21, %c0_22] : memref<9x8x4xf32, #tpu.memory_space<vmem>>, vector<1x8x4xf32>
    %54 = vector.shape_cast %53 : vector<1x8x4xf32> to vector<8x4xf32>
    %cst_23 = arith.constant dense<0.000000e+00> : vector<8x256xf32>
    %55 = tpu.matmul %54, %52, %cst_23 {dimension_numbers = #tpu.dot_dimension_numbers<[1], [0], [0], [1], [0, 0, 1, 1], [], []>} : vector<8x4xf32>, vector<4x256xf32>, vector<8x256xf32> -> vector<8x256xf32>
    %56 = arith.addf %45, %55 : vector<8x256xf32>
    %c4 = arith.constant 4 : index
    %c0_24 = arith.constant 0 : index
    %c0_25 = arith.constant 0 : index
    %57 = vector.load %arg2[%c4, %c0_24, %c0_25] : memref<9x8x4xf32, #tpu.memory_space<vmem>>, vector<1x8x4xf32>
    %58 = vector.shape_cast %57 : vector<1x8x4xf32> to vector<8x4xf32>
    %cst_26 = arith.constant dense<0.000000e+00> : vector<8x256xf32>
    %59 = tpu.matmul %58, %0, %cst_26 {dimension_numbers = #tpu.dot_dimension_numbers<[1], [0], [0], [1], [0, 0, 1, 1], [], []>} : vector<8x4xf32>, vector<4x256xf32>, vector<8x256xf32> -> vector<8x256xf32>
    %60 = arith.addf %56, %59 : vector<8x256xf32>
    %c255_i32_27 = arith.constant 255 : i32
    %61 = tpu.dynamic_rotate %0 by %c255_i32_27 dim 1 : vector<4x256xf32>, i32 -> vector<4x256xf32>
    %c14_i32_28 = arith.constant 14 : i32
    %62 = vector.broadcast %c14_i32_28 : i32 to vector<1x256xi32>
    %63 = arith.cmpi sle, %5, %62 : vector<1x256xi32>
    %cst_29 = arith.constant 0.000000e+00 : f32
    %64 = vector.shape_cast %63 : vector<1x256xi1> to vector<1x256xi1>
    %65 = vector.broadcast %64 : vector<1x256xi1> to vector<4x256xi1>
    %66 = vector.broadcast %cst_29 : f32 to vector<4x256xf32>
    %67 = arith.select %65, %61, %66 : vector<4x256xi1>, vector<4x256xf32>
    %c5 = arith.constant 5 : index
    %c0_30 = arith.constant 0 : index
    %c0_31 = arith.constant 0 : index
    %68 = vector.load %arg2[%c5, %c0_30, %c0_31] : memref<9x8x4xf32, #tpu.memory_space<vmem>>, vector<1x8x4xf32>
    %69 = vector.shape_cast %68 : vector<1x8x4xf32> to vector<8x4xf32>
    %cst_32 = arith.constant dense<0.000000e+00> : vector<8x256xf32>
    %70 = tpu.matmul %69, %67, %cst_32 {dimension_numbers = #tpu.dot_dimension_numbers<[1], [0], [0], [1], [0, 0, 1, 1], [], []>} : vector<8x4xf32>, vector<4x256xf32>, vector<8x256xf32> -> vector<8x256xf32>
    %71 = arith.addf %60, %70 : vector<8x256xf32>
    %c241_i32 = arith.constant 241 : i32
    %72 = tpu.dynamic_rotate %0 by %c241_i32 dim 1 : vector<4x256xf32>, i32 -> vector<4x256xf32>
    %c240_i32 = arith.constant 240 : i32
    %73 = vector.broadcast %c240_i32 : i32 to vector<1x256xi32>
    %74 = arith.cmpi slt, %3, %73 : vector<1x256xi32>
    %c1_i32_33 = arith.constant 1 : i32
    %75 = vector.broadcast %c1_i32_33 : i32 to vector<1x256xi32>
    %76 = arith.cmpi sge, %5, %75 : vector<1x256xi32>
    %77 = arith.andi %74, %76 : vector<1x256xi1>
    %cst_34 = arith.constant 0.000000e+00 : f32
    %78 = vector.shape_cast %77 : vector<1x256xi1> to vector<1x256xi1>
    %79 = vector.broadcast %78 : vector<1x256xi1> to vector<4x256xi1>
    %80 = vector.broadcast %cst_34 : f32 to vector<4x256xf32>
    %81 = arith.select %79, %72, %80 : vector<4x256xi1>, vector<4x256xf32>
    %c6 = arith.constant 6 : index
    %c0_35 = arith.constant 0 : index
    %c0_36 = arith.constant 0 : index
    %82 = vector.load %arg2[%c6, %c0_35, %c0_36] : memref<9x8x4xf32, #tpu.memory_space<vmem>>, vector<1x8x4xf32>
    %83 = vector.shape_cast %82 : vector<1x8x4xf32> to vector<8x4xf32>
    %cst_37 = arith.constant dense<0.000000e+00> : vector<8x256xf32>
    %84 = tpu.matmul %83, %81, %cst_37 {dimension_numbers = #tpu.dot_dimension_numbers<[1], [0], [0], [1], [0, 0, 1, 1], [], []>} : vector<8x4xf32>, vector<4x256xf32>, vector<8x256xf32> -> vector<8x256xf32>
    %85 = arith.addf %71, %84 : vector<8x256xf32>
    %c240_i32_38 = arith.constant 240 : i32
    %86 = tpu.dynamic_rotate %0 by %c240_i32_38 dim 1 : vector<4x256xf32>, i32 -> vector<4x256xf32>
    %c240_i32_39 = arith.constant 240 : i32
    %87 = vector.broadcast %c240_i32_39 : i32 to vector<1x256xi32>
    %88 = arith.cmpi slt, %3, %87 : vector<1x256xi32>
    %cst_40 = arith.constant 0.000000e+00 : f32
    %89 = vector.shape_cast %88 : vector<1x256xi1> to vector<1x256xi1>
    %90 = vector.broadcast %89 : vector<1x256xi1> to vector<4x256xi1>
    %91 = vector.broadcast %cst_40 : f32 to vector<4x256xf32>
    %92 = arith.select %90, %86, %91 : vector<4x256xi1>, vector<4x256xf32>
    %c7 = arith.constant 7 : index
    %c0_41 = arith.constant 0 : index
    %c0_42 = arith.constant 0 : index
    %93 = vector.load %arg2[%c7, %c0_41, %c0_42] : memref<9x8x4xf32, #tpu.memory_space<vmem>>, vector<1x8x4xf32>
    %94 = vector.shape_cast %93 : vector<1x8x4xf32> to vector<8x4xf32>
    %cst_43 = arith.constant dense<0.000000e+00> : vector<8x256xf32>
    %95 = tpu.matmul %94, %92, %cst_43 {dimension_numbers = #tpu.dot_dimension_numbers<[1], [0], [0], [1], [0, 0, 1, 1], [], []>} : vector<8x4xf32>, vector<4x256xf32>, vector<8x256xf32> -> vector<8x256xf32>
    %96 = arith.addf %85, %95 : vector<8x256xf32>
    %c239_i32 = arith.constant 239 : i32
    %97 = tpu.dynamic_rotate %0 by %c239_i32 dim 1 : vector<4x256xf32>, i32 -> vector<4x256xf32>
    %c240_i32_44 = arith.constant 240 : i32
    %98 = vector.broadcast %c240_i32_44 : i32 to vector<1x256xi32>
    %99 = arith.cmpi slt, %3, %98 : vector<1x256xi32>
    %c14_i32_45 = arith.constant 14 : i32
    %100 = vector.broadcast %c14_i32_45 : i32 to vector<1x256xi32>
    %101 = arith.cmpi sle, %5, %100 : vector<1x256xi32>
    %102 = arith.andi %99, %101 : vector<1x256xi1>
    %cst_46 = arith.constant 0.000000e+00 : f32
    %103 = vector.shape_cast %102 : vector<1x256xi1> to vector<1x256xi1>
    %104 = vector.broadcast %103 : vector<1x256xi1> to vector<4x256xi1>
    %105 = vector.broadcast %cst_46 : f32 to vector<4x256xf32>
    %106 = arith.select %104, %97, %105 : vector<4x256xi1>, vector<4x256xf32>
    %c8 = arith.constant 8 : index
    %c0_47 = arith.constant 0 : index
    %c0_48 = arith.constant 0 : index
    %107 = vector.load %arg2[%c8, %c0_47, %c0_48] : memref<9x8x4xf32, #tpu.memory_space<vmem>>, vector<1x8x4xf32>
    %108 = vector.shape_cast %107 : vector<1x8x4xf32> to vector<8x4xf32>
    %cst_49 = arith.constant dense<0.000000e+00> : vector<8x256xf32>
    %109 = tpu.matmul %108, %106, %cst_49 {dimension_numbers = #tpu.dot_dimension_numbers<[1], [0], [0], [1], [0, 0, 1, 1], [], []>} : vector<8x4xf32>, vector<4x256xf32>, vector<8x256xf32> -> vector<8x256xf32>
    %110 = arith.addf %96, %109 : vector<8x256xf32>
    %c0_50 = arith.constant 0 : index
    %c0_51 = arith.constant 0 : index
    %111 = vector.load %arg3[%c0_50, %c0_51] : memref<8x1xf32, #tpu.memory_space<vmem>>, vector<8x1xf32>
    %112 = vector.broadcast %111 : vector<8x1xf32> to vector<8x256xf32>
    %113 = arith.addf %110, %112 : vector<8x256xf32>
    %cst_52 = arith.constant 0.000000e+00 : f32
    %114 = vector.broadcast %cst_52 : f32 to vector<8x256xf32>
    %115 = arith.maximumf %113, %114 : vector<8x256xf32>
    %c0_53 = arith.constant 0 : index
    %c0_54 = arith.constant 0 : index
    %116 = vector.load %arg4[%c0_53, %c0_54] : memref<8x8xf32, #tpu.memory_space<vmem>>, vector<8x8xf32>
    %cst_55 = arith.constant dense<0.000000e+00> : vector<8x256xf32>
    %117 = tpu.matmul %116, %115, %cst_55 {dimension_numbers = #tpu.dot_dimension_numbers<[1], [0], [0], [1], [0, 0, 1, 1], [], []>} : vector<8x8xf32>, vector<8x256xf32>, vector<8x256xf32> -> vector<8x256xf32>
    %c0_56 = arith.constant 0 : index
    %c0_57 = arith.constant 0 : index
    %118 = vector.load %arg5[%c0_56, %c0_57] : memref<8x1xf32, #tpu.memory_space<vmem>>, vector<8x1xf32>
    %119 = vector.broadcast %118 : vector<8x1xf32> to vector<8x256xf32>
    %120 = arith.addf %117, %119 : vector<8x256xf32>
    %c0_58 = arith.constant 0 : index
    %c0_59 = arith.constant 0 : index
    %121 = vector.load %arg6[%c0_58, %c0_59] : memref<8x256xf32, #tpu.memory_space<vmem>>, vector<8x256xf32>
    tpu.vector_store %arg6[%c0_58, %c0_59], %120 {strides = array<i32>} : memref<8x256xf32, #tpu.memory_space<vmem>>, vector<8x256xf32>,
    return
  }
  func.func @transform_0(%arg0: i32) -> (i32, i32) {
    %c0_i32 = arith.constant 0 : i32
    %c0_i32_0 = arith.constant 0 : i32
    return %c0_i32, %arg0 : i32, i32
  }
  func.func @transform_1(%arg0: i32) -> (i32, i32, i32) {
    %c0_i32 = arith.constant 0 : i32
    %c0_i32_0 = arith.constant 0 : i32
    %c0_i32_1 = arith.constant 0 : i32
    %c0_i32_2 = arith.constant 0 : i32
    return %c0_i32, %c0_i32_0, %c0_i32_1 : i32, i32, i32
  }
  func.func @transform_2(%arg0: i32) -> (i32, i32) {
    %c0_i32 = arith.constant 0 : i32
    %c0_i32_0 = arith.constant 0 : i32
    %c0_i32_1 = arith.constant 0 : i32
    return %c0_i32, %c0_i32_0 : i32, i32
  }
  func.func @transform_3(%arg0: i32) -> (i32, i32) {
    %c0_i32 = arith.constant 0 : i32
    %c0_i32_0 = arith.constant 0 : i32
    %c0_i32_1 = arith.constant 0 : i32
    return %c0_i32, %c0_i32_0 : i32, i32
  }
  func.func @transform_4(%arg0: i32) -> (i32, i32) {
    %c0_i32 = arith.constant 0 : i32
    %c0_i32_0 = arith.constant 0 : i32
    %c0_i32_1 = arith.constant 0 : i32
    return %c0_i32, %c0_i32_0 : i32, i32
  }
  func.func @transform_5(%arg0: i32) -> (i32, i32) {
    %c0_i32 = arith.constant 0 : i32
    %c0_i32_0 = arith.constant 0 : i32
    return %c0_i32, %arg0 : i32, i32
  }
}

</mosaic_0001>

<llo_original>
// kernel: multi_output_net.1
$region0: #{multi_output_net.1}
  #allocation0 [shape = 'u32[]', space=smem, size = 0x4, offset = 0x4, fixed_abs, tag = 'smem constant byte address 0x4 - core index']
  #allocation1 [shape = 'u32[144,128]{1,0:T(1,128)}', space=vmem, size = 0x12000, scoped, tag = 'internal scratch']
  %s0 = inlined_call_operand.vmem [shape: f32[4,512], index: 0, kind: input, shape index: {}]
  %s1 = inlined_call_operand.vmem [shape: f32[9,8,4], index: 1, kind: input, shape index: {}]
  %s2 = inlined_call_operand.vmem [shape: f32[8,1], index: 2, kind: input, shape index: {}]
  %s3 = inlined_call_operand.vmem [shape: f32[8,8], index: 3, kind: input, shape index: {}]
  %s4 = inlined_call_operand.vmem [shape: f32[8,1], index: 4, kind: input, shape index: {}]
  %s5 = inlined_call_operand.vmem [shape: f32[8,512], index: 5, kind: output, shape index: {}]
  %s6 = sld [smem:[#allocation0]]
  $region53: #{multi_output_net.1} parent=0
    _
  %s8 = ssub.s32 1, %s6
  %s9 = scalar_select 0, %s8, %s6
  loop: start=0, step=1, limit=4
  $region2: #{multi_output_net.1} parent=0 // loop_pre_header
    _
  $region3: #{multi_output_net.1} parent=0 // loop_header
    %s11 = sphi 0, %s15
    %p12 = scmp.ge.s32.totalorder %s11, 4
    %s21 = sphi 0, %s23
    %s24 = sphi 0, %s21
    %s25 = sphi 0, %s24
    %s41 = sphi 0, %s25
    %s45 = sphi 0, %s45
    %s47 = sphi 0, %s45
    %s48 = sphi 0, %s47
    %s62 = sphi 0, %s48
    %s66 = sphi 0, %s66
    %s68 = sphi 0, %s66
    %s69 = sphi 0, %s68
    %s83 = sphi 0, %s69
    %s87 = sphi 0, %s87
    %s89 = sphi 0, %s87
    %s90 = sphi 0, %s89
    %s104 = sphi 0, %s90
    %s108 = sphi 0, %s108
    %s110 = sphi 0, %s108
    %s111 = sphi 0, %s110
    %s125 = sphi 0, %s111
    %s131 = sphi 0, %s133
    %s134 = sphi 0, %s131
    %s135 = sphi 0, %s134
    %s151 = sphi 0, %s135
  $region4: #{multi_output_net.1} parent=0 // loop_header_branch
    %14 = sbr.rel (%p12) target = $region8
  $region5: #{multi_output_net.1} parent=0 // loop_body
    %s16 = ssub.s32 %s11, 1
    %s17 = ssub.s32 %s11, 2
    %s18 = sadd.s32 %s11, 1
    %s19 = ssub.s32 %s11, %s18
    %p20 = scmp.eq.s32.totalorder %s19, 0
    %s22 = sadd.s32 %s21, 1
    %s23 = scalar_select %p20, %s21, %s22
    %p26 = pneg %p20
    %p27 = scmp.eq.s32.totalorder %s11, 1
    %p28 = por %p26, %p27
    %p29 = scmp.ne.s32.totalorder %s21, %s24
    %p30 = scmp.eq.s32.totalorder %s11, 0
    %p31 = por %p29, %p30
    %p32 = scmp.ne.s32.totalorder %s21, %s24
    %p33 = scmp.eq.s32.totalorder %s16, 1
    %p34 = por %p32, %p33
    %p35 = scmp.ne.s32.totalorder %s24, %s25
    %p36 = scmp.eq.s32.totalorder %s16, 0
    %p37 = por %p35, %p36
    %p38 = scmp.ne.s32.totalorder %s24, %s25
    %p39 = scmp.eq.s32.totalorder %s17, 1
    %p40 = por %p38, %p39
    %p42 = scmp.ne.s32.totalorder %s25, %s41
    %p43 = scmp.eq.s32.totalorder %s17, 0
    %p44 = por %p42, %p43
    %s46 = sadd.s32 %s45, 1
    %p49 = scmp.eq.s32.totalorder %s11, 1
    %p50 = scmp.ne.s32.totalorder %s45, %s47
    %p51 = scmp.eq.s32.totalorder %s11, 0
    %p52 = por %p50, %p51
    %p53 = scmp.ne.s32.totalorder %s45, %s47
    %p54 = scmp.eq.s32.totalorder %s16, 1
    %p55 = por %p53, %p54
    %p56 = scmp.ne.s32.totalorder %s47, %s48
    %p57 = scmp.eq.s32.totalorder %s16, 0
    %p58 = por %p56, %p57
    %p59 = scmp.ne.s32.totalorder %s47, %s48
    %p60 = scmp.eq.s32.totalorder %s17, 1
    %p61 = por %p59, %p60
    %p63 = scmp.ne.s32.totalorder %s48, %s62
    %p64 = scmp.eq.s32.totalorder %s17, 0
    %p65 = por %p63, %p64
    %s67 = sadd.s32 %s66, 1
    %p70 = scmp.eq.s32.totalorder %s11, 1
    %p71 = scmp.ne.s32.totalorder %s66, %s68
    %p72 = scmp.eq.s32.totalorder %s11, 0
    %p73 = por %p71, %p72
    %p74 = scmp.ne.s32.totalorder %s66, %s68
    %p75 = scmp.eq.s32.totalorder %s16, 1
    %p76 = por %p74, %p75
    %p77 = scmp.ne.s32.totalorder %s68, %s69
    %p78 = scmp.eq.s32.totalorder %s16, 0
    %p79 = por %p77, %p78
    %p80 = scmp.ne.s32.totalorder %s68, %s69
    %p81 = scmp.eq.s32.totalorder %s17, 1
    %p82 = por %p80, %p81
    %p84 = scmp.ne.s32.totalorder %s69, %s83
    %p85 = scmp.eq.s32.totalorder %s17, 0
    %p86 = por %p84, %p85
    %s88 = sadd.s32 %s87, 1
    %p91 = scmp.eq.s32.totalorder %s11, 1
    %p92 = scmp.ne.s32.totalorder %s87, %s89
    %p93 = scmp.eq.s32.totalorder %s11, 0
    %p94 = por %p92, %p93
    %p95 = scmp.ne.s32.totalorder %s87, %s89
    %p96 = scmp.eq.s32.totalorder %s16, 1
    %p97 = por %p95, %p96
    %p98 = scmp.ne.s32.totalorder %s89, %s90
    %p99 = scmp.eq.s32.totalorder %s16, 0
    %p100 = por %p98, %p99
    %p101 = scmp.ne.s32.totalorder %s89, %s90
    %p102 = scmp.eq.s32.totalorder %s17, 1
    %p103 = por %p101, %p102
    %p105 = scmp.ne.s32.totalorder %s90, %s104
    %p106 = scmp.eq.s32.totalorder %s17, 0
    %p107 = por %p105, %p106
    %s109 = sadd.s32 %s108, 1
    %p112 = scmp.eq.s32.totalorder %s11, 1
    %p113 = scmp.ne.s32.totalorder %s108, %s110
    %p114 = scmp.eq.s32.totalorder %s11, 0
    %p115 = por %p113, %p114
    %p116 = scmp.ne.s32.totalorder %s108, %s110
    %p117 = scmp.eq.s32.totalorder %s16, 1
    %p118 = por %p116, %p117
    %p119 = scmp.ne.s32.totalorder %s110, %s111
    %p120 = scmp.eq.s32.totalorder %s16, 0
    %p121 = por %p119, %p120
    %p122 = scmp.ne.s32.totalorder %s110, %s111
    %p123 = scmp.eq.s32.totalorder %s17, 1
    %p124 = por %p122, %p123
    %p126 = scmp.ne.s32.totalorder %s111, %s125
    %p127 = scmp.eq.s32.totalorder %s17, 0
    %p128 = por %p126, %p127
    %s129 = ssub.s32 %s11, %s18
    %p130 = scmp.eq.s32.totalorder %s129, 0
    %s132 = sadd.s32 %s131, 1
    %s133 = scalar_select %p130, %s131, %s132
    %p136 = pneg %p130
    %p137 = scmp.eq.s32.totalorder %s11, 1
    %p138 = por %p136, %p137
    %p139 = scmp.ne.s32.totalorder %s131, %s134
    %p140 = scmp.eq.s32.totalorder %s11, 0
    %p141 = por %p139, %p140
    %p142 = scmp.ne.s32.totalorder %s131, %s134
    %p143 = scmp.eq.s32.totalorder %s16, 1
    %p144 = por %p142, %p143
    %p145 = scmp.ne.s32.totalorder %s134, %s135
    %p146 = scmp.eq.s32.totalorder %s16, 0
    %p147 = por %p145, %p146
    %p148 = scmp.ne.s32.totalorder %s134, %s135
    %p149 = scmp.eq.s32.totalorder %s17, 1
    %p150 = por %p148, %p149
    %p152 = scmp.ne.s32.totalorder %s135, %s151
    %p153 = scmp.eq.s32.totalorder %s17, 0
    %p154 = por %p152, %p153
    %p155 = scmp.le.s32.totalorder 1, %s11
    %p156 = scmp.lt.s32.totalorder %s11, 3
    %p157 = pnand %p155, %p156
    %p158 = pneg %p157
    // Predicated region
    $region9: #{multi_output_net.1} parent=5 // pred_check
      _
    $region10: #{multi_output_net.1} parent=5 // pred_check_branch
      %160 = sbr.rel (%p157) target = $region12
    $region11: #{multi_output_net.1} parent=5 // pred_region
      %s161 = ssub.s32 %s11, 1
      // Predicated region
      $region13: #{multi_output_net.1} parent=11 // pred_check
        %p162 = pneg %p58
      $region14: #{multi_output_net.1} parent=11 // pred_check_branch
        %164 = sbr.rel (%p162) target = $region16
      $region15: #{multi_output_net.1} parent=11 // pred_region
        _
      $region16: #{multi_output_net.1} parent=11 // pred_fallthru
        _
      // Predicated region
      $region17: #{multi_output_net.1} parent=11 // pred_check
        %p165 = pneg %p79
      $region18: #{multi_output_net.1} parent=11 // pred_check_branch
        %167 = sbr.rel (%p165) target = $region20
      $region19: #{multi_output_net.1} parent=11 // pred_region
        _
      $region20: #{multi_output_net.1} parent=11 // pred_fallthru
        _
      // Predicated region
      $region21: #{multi_output_net.1} parent=11 // pred_check
        %p168 = pneg %p100
      $region22: #{multi_output_net.1} parent=11 // pred_check_branch
        %170 = sbr.rel (%p168) target = $region24
      $region23: #{multi_output_net.1} parent=11 // pred_region
        _
      $region24: #{multi_output_net.1} parent=11 // pred_fallthru
        _
      // Predicated region
      $region25: #{multi_output_net.1} parent=11 // pred_check
        %p171 = pneg %p121
      $region26: #{multi_output_net.1} parent=11 // pred_check_branch
        %173 = sbr.rel (%p171) target = $region28
      $region27: #{multi_output_net.1} parent=11 // pred_region
        _
      $region28: #{multi_output_net.1} parent=11 // pred_fallthru
        _
    $region12: #{multi_output_net.1} parent=5 // pred_fallthru
      _
    %p174 = scmp.lt.s32.totalorder %s11, 2
    // Predicated region
    $region29: #{multi_output_net.1} parent=5 // pred_check
      %p175 = pneg %p174
    $region30: #{multi_output_net.1} parent=5 // pred_check_branch
      %177 = sbr.rel (%p175) target = $region32
    $region31: #{multi_output_net.1} parent=5 // pred_region
      // Predicated region
      $region33: #{multi_output_net.1} parent=31 // pred_check
        %p178 = pneg %p31
      $region34: #{multi_output_net.1} parent=31 // pred_check_branch
        %180 = sbr.rel (%p178) target = $region36
      $region35: #{multi_output_net.1} parent=31 // pred_region
        %s181 = smul.u32 2, %s11
        %p182 = scmp.lt.s32.totalorder %s181, 3
        %s183 = scalar_select %p182, %s181, 3
        %s184 = smul.addr %s183, 4
        %s185 = scalar_lea.vmem %s0, %s184
        %s186 = smul.u32 2, %s11
      $region36: #{multi_output_net.1} parent=31 // pred_fallthru
        _
    $region32: #{multi_output_net.1} parent=5 // pred_fallthru
      _
    %p187 = scmp.le.s32.totalorder 1, %s11
    %p188 = scmp.lt.s32.totalorder %s11, 3
    %p189 = pnand %p187, %p188
    %p190 = pneg %p189
    // Predicated region
    $region37: #{multi_output_net.1} parent=5 // pred_check
      _
    $region38: #{multi_output_net.1} parent=5 // pred_check_branch
      %192 = sbr.rel (%p189) target = $region40
    $region39: #{multi_output_net.1} parent=5 // pred_region
      %s193 = ssub.s32 %s11, 1
      %s194 = smul.u32 2, %s16
      %p195 = scmp.lt.s32.totalorder %s194, 3
      %s196 = scalar_select %p195, %s194, 3
      %s197 = smul.addr %s196, 4
      %s198 = scalar_lea.vmem %s0, %s197
      %p199 = pneg %p37
      %p200 = pneg %p34
      %p201 = pneg %p58
      %p202 = pneg %p55
      %p203 = pneg %p79
      %p204 = pneg %p76
      %p205 = pneg %p100
      %p206 = pneg %p97
      %p207 = pneg %p121
      %p208 = pneg %p118
      %p209 = pneg %p147
      %p210 = pneg %p144
      %s211 = smul.u32 2, %s16
      %p212 = scmp.lt.s32.totalorder %s211, 3
      %s213 = scalar_select %p212, %s211, 3
      %s214 = smul.addr %s213, 8
      %s215 = scalar_lea.vmem %s5, %s214
      %s216 = smul.u32 2, %s16
      %p217 = scmp.lt.s32.totalorder %s216, 3
      %s218 = scalar_select %p217, %s216, 3
      %s219 = smul.addr %s218, 4
      %s220 = scalar_lea.vmem %s0, %s219
      %s221 = smul.u32 2, %s16
      %s222 = smul.u32 2, %s16
      %p223 = scmp.lt.s32.totalorder %s222, 3
      %s224 = scalar_select %p223, %s222, 3
      %s225 = smul.addr %s224, 8
      %s226 = scalar_lea.vmem %s5, %s225
      %s227 = smul.u32 2, %s16
      %v228 = vld [vmem:[%s220] sm:$0xff]
      %v229 = vlaneseq
      %v230 = vand.u32 %v229, 127
      %v231 = vadd.s32 %v230, 128
      %v232 = vand.u32 %v230, 255
      %v233 = vand.u32 %v231, 255
      %v234 = vand.u32 %v232, 15
      %v235 = vand.u32 %v233, 15
      %v237 = vcombine.high %v228, %v228
      %239 = vrot.lane.b32.xlu0 %v228, 17
      %v240 = vpop.permute.xlu0 %239
      %241 = vrot.lane.b32.xlu0 %v237, 17
      %v242 = vpop.permute.xlu0 %241
      %vm243 = vcmp.lt.s32.totalorder %v230, 17
      %v244 = vsel %vm243, %v240, %v242
      %v245 = vsel %vm243, %v242, %v240
      %vm246 = vcmp.ge.s32.totalorder %v232, 16
      %vm247 = vcmp.ge.s32.totalorder %v233, 16
      %vm248 = vcmp.ge.s32.totalorder %v234, 1
      %vm249 = vcmp.ge.s32.totalorder %v235, 1
      %vm250 = vmand %vm246, %vm248
      %vm251 = vmand %vm247, %vm249
      %v252 = vsel %vm250, 1, 0
      %v253 = vsel %vm251, 1, 0
      %vm254 = vcmp.eq.s32.totalorder %v252, 1
      %vm255 = vcmp.eq.s32.totalorder %v253, 1
      %v256 = vsel %vm254, %v245, 0.0
      %v257 = vsel %vm255, %v244, 0.0
      %v258 = vld [vmem:[%s1] sm:$0xff]
      %259 = vrot.lane.b32.xlu0 %v228, 16
      %v260 = vpop.permute.xlu0 %259
      %261 = vrot.lane.b32.xlu0 %v237, 16
      %v262 = vpop.permute.xlu0 %261
      %vm263 = vcmp.lt.s32.totalorder %v230, 16
      %v264 = vsel %vm263, %v260, %v262
      %v265 = vsel %vm263, %v262, %v260
      %v266 = vsel %vm246, 1, 0
      %v267 = vsel %vm247, 1, 0
      %vm268 = vcmp.eq.s32.totalorder %v266, 1
      %vm269 = vcmp.eq.s32.totalorder %v267, 1
      %v270 = vsel %vm268, %v265, 0.0
      %v271 = vsel %vm269, %v264, 0.0
      %s272 = scalar_lea.vmem %s1, 8
      %v273 = vld [vmem:[%s272] sm:$0xff]
      %vm274 = vcmask 31744
      %v276 = vsel %vm274, %v273, 0
      %vm278 = vcmask 1043456
      %v280 = vsel %vm278, %v270, 0
      %v283 = vsel %vm278, %v271, 0
      %285 = vmatprep.subr.mxu0 0.0
      %286 = vmatpush1.msra.mxu0 0.0
      %287 = vmatprep.subr.mxu0 0.0
      %288 = vmatpush1.msra.mxu0 0.0
      %289 = vmatprep.subr.mxu0 0.0
      %290 = vmatpush1.msra.mxu0 0.0
      %291 = vmatprep.subr.mxu0 0.0
      %292 = vmatpush1.msra.mxu0 0.0
      %293 = vmatprep.subr.mxu0 0.0
      %294 = vmatpush1.msra.mxu0 0.0
      %295 = vmatprep.subr.mxu0 0.0
      %296 = vmatpush1.msra.mxu0 0.0
      %297 = vmatprep.subr.mxu0 0.0
      %298 = vmatpush1.msra.mxu0 0.0
      %299 = vmatprep.subr.mxu0 0.0
      %300 = vmatpush1.msra.mxu0 0.0
      %301 = vmatprep.subr.mxu0 0.0
      %302 = vmatpush1.msra.mxu0 0.0
      %303 = vmatprep.subr.mxu0 0.0
      %304 = vmatpush1.msra.mxu0 0.0
      %305 = vmatprep.subr.mxu0 0.0
      %306 = vmatpush1.msra.mxu0 0.0
      %307 = vmatprep.subr.mxu0 0.0
      %308 = vmatpush1.msra.mxu0 0.0
      %309 = vmatprep.subr.mxu0 0.0
      %310 = vmatpush1.msra.mxu0 0.0
      %311 = vmatprep.subr.mxu0 0.0
      %312 = vmatpush1.msra.mxu0 0.0
      %313 = vmatprep.subr.mxu0 0.0
      %314 = vmatpush1.msra.mxu0 0.0
      %315 = vmatprep.subr.mxu0 %v283
      %316 = vmatpush1.msra.mxu0 %v280
      %317 = vmatprep.subr.mxu0 0.0
      %318 = vmatpush2.msra.mxu0 0.0
      %319 = vmatprep.subr.mxu0 0.0
      %320 = vmatpush2.msra.mxu0 0.0
      %321 = vmatprep.subr.mxu0 0.0
      %322 = vmatpush2.msra.mxu0 0.0
      %323 = vmatprep.subr.mxu0 0.0
      %324 = vmatpush2.msra.mxu0 0.0
      %325 = vmatprep.subr.mxu0 0.0
      %326 = vmatpush2.msra.mxu0 0.0
      %327 = vmatprep.subr.mxu0 0.0
      %328 = vmatpush2.msra.mxu0 0.0
      %329 = vmatprep.subr.mxu0 0.0
      %330 = vmatpush2.msra.mxu0 0.0
      %331 = vmatprep.subr.mxu0 0.0
      %332 = vmatpush2.msra.mxu0 0.0
      %333 = vmatprep.subr.mxu0 0.0
      %334 = vmatpush2.msra.mxu0 0.0
      %335 = vmatprep.subr.mxu0 0.0
      %336 = vmatpush2.msra.mxu0 0.0
      %337 = vmatprep.subr.mxu0 0.0
      %338 = vmatpush2.msra.mxu0 0.0
      %339 = vmatprep.subr.mxu0 0.0
      %340 = vmatpush2.msra.mxu0 0.0
      %341 = vmatprep.subr.mxu0 0.0
      %342 = vmatpush2.msra.mxu0 0.0
      %343 = vmatprep.subr.mxu0 0.0
      %344 = vmatpush2.msra.mxu0 0.0
      %345 = vmatprep.subr.mxu0 0.0
      %346 = vmatpush2.msra.mxu0 0.0
      %347 = vmatprep.subr.mxu0 0.0
      %348 = vmatpush2.msra.mxu0 0.0
      %349 = vmatprep.mubr.f32.mxu0 0.0
      %350 = vmatmul.mubr.f32.gmra.mxu0 %v276
      %v351 = vpop.f32.mrf.mxu0
      %v352 = vadd.f32 0.0, %v351
      %v353 = vpop.f32.mrf.mxu0
      %v354 = vadd.f32 0.0, %v353
      %355 = vdwg.mxu0
      %v357 = vsel %vm274, %v258, 0
      %v360 = vsel %vm278, %v256, 0
      %v363 = vsel %vm278, %v257, 0
      %365 = vmatprep.subr.mxu0 0.0
      %366 = vmatpush1.msra.mxu0 0.0
      %367 = vmatprep.subr.mxu0 0.0
      %368 = vmatpush1.msra.mxu0 0.0
      %369 = vmatprep.subr.mxu0 0.0
      %370 = vmatpush1.msra.mxu0 0.0
      %371 = vmatprep.subr.mxu0 0.0
      %372 = vmatpush1.msra.mxu0 0.0
      %373 = vmatprep.subr.mxu0 0.0
      %374 = vmatpush1.msra.mxu0 0.0
      %375 = vmatprep.subr.mxu0 0.0
      %376 = vmatpush1.msra.mxu0 0.0
      %377 = vmatprep.subr.mxu0 0.0
      %378 = vmatpush1.msra.mxu0 0.0
      %379 = vmatprep.subr.mxu0 0.0
      %380 = vmatpush1.msra.mxu0 0.0
      %381 = vmatprep.subr.mxu0 0.0
      %382 = vmatpush1.msra.mxu0 0.0
      %383 = vmatprep.subr.mxu0 0.0
      %384 = vmatpush1.msra.mxu0 0.0
      %385 = vmatprep.subr.mxu0 0.0
      %386 = vmatpush1.msra.mxu0 0.0
      %387 = vmatprep.subr.mxu0 0.0
      %388 = vmatpush1.msra.mxu0 0.0
      %389 = vmatprep.subr.mxu0 0.0
      %390 = vmatpush1.msra.mxu0 0.0
      %391 = vmatprep.subr.mxu0 0.0
      %392 = vmatpush1.msra.mxu0 0.0
      %393 = vmatprep.subr.mxu0 0.0
      %394 = vmatpush1.msra.mxu0 0.0
      %395 = vmatprep.subr.mxu0 %v363
      %396 = vmatpush1.msra.mxu0 %v360
      %397 = vmatprep.subr.mxu0 0.0
      %398 = vmatpush2.msra.mxu0 0.0
      %399 = vmatprep.subr.mxu0 0.0
      %400 = vmatpush2.msra.mxu0 0.0
      %401 = vmatprep.subr.mxu0 0.0
      %402 = vmatpush2.msra.mxu0 0.0
      %403 = vmatprep.subr.mxu0 0.0
      %404 = vmatpush2.msra.mxu0 0.0
      %405 = vmatprep.subr.mxu0 0.0
      %406 = vmatpush2.msra.mxu0 0.0
      %407 = vmatprep.subr.mxu0 0.0
      %408 = vmatpush2.msra.mxu0 0.0
      %409 = vmatprep.subr.mxu0 0.0
      %410 = vmatpush2.msra.mxu0 0.0
      %411 = vmatprep.subr.mxu0 0.0
      %412 = vmatpush2.msra.mxu0 0.0
      %413 = vmatprep.subr.mxu0 0.0
      %414 = vmatpush2.msra.mxu0 0.0
      %415 = vmatprep.subr.mxu0 0.0
      %416 = vmatpush2.msra.mxu0 0.0
      %417 = vmatprep.subr.mxu0 0.0
      %418 = vmatpush2.msra.mxu0 0.0
      %419 = vmatprep.subr.mxu0 0.0
      %420 = vmatpush2.msra.mxu0 0.0
      %421 = vmatprep.subr.mxu0 0.0
      %422 = vmatpush2.msra.mxu0 0.0
      %423 = vmatprep.subr.mxu0 0.0
      %424 = vmatpush2.msra.mxu0 0.0
      %425 = vmatprep.subr.mxu0 0.0
      %426 = vmatpush2.msra.mxu0 0.0
      %427 = vmatprep.subr.mxu0 0.0
      %428 = vmatpush2.msra.mxu0 0.0
      %429 = vmatprep.mubr.f32.mxu0 0.0
      %430 = vmatmul.mubr.f32.gmra.mxu0 %v357
      %v431 = vpop.f32.mrf.mxu0
      %v432 = vadd.f32 %v352, %v431
      %v433 = vpop.f32.mrf.mxu0
      %v434 = vadd.f32 %v354, %v433
      %435 = vdwg.mxu0
      %436 = vrot.lane.b32.xlu0 %v228, 15
      %v437 = vpop.permute.xlu0 %436
      %438 = vrot.lane.b32.xlu0 %v237, 15
      %v439 = vpop.permute.xlu0 %438
      %vm440 = vcmp.lt.s32.totalorder %v230, 15
      %v441 = vsel %vm440, %v437, %v439
      %v442 = vsel %vm440, %v439, %v437
      %vm443 = vcmp.le.s32.totalorder %v234, 14
      %vm444 = vcmp.le.s32.totalorder %v235, 14
      %vm445 = vmand %vm246, %vm443
      %vm446 = vmand %vm247, %vm444
      %v447 = vsel %vm445, 1, 0
      %v448 = vsel %vm446, 1, 0
      %vm449 = vcmp.eq.s32.totalorder %v447, 1
      %vm450 = vcmp.eq.s32.totalorder %v448, 1
      %v451 = vsel %vm449, %v442, 0.0
      %v452 = vsel %vm450, %v441, 0.0
      %s453 = scalar_lea.vmem %s1, 16
      %v454 = vld [vmem:[%s453] sm:$0xff]
      %v456 = vsel %vm274, %v454, 0
      %v459 = vsel %vm278, %v451, 0
      %v462 = vsel %vm278, %v452, 0
      %464 = vmatprep.subr.mxu0 0.0
      %465 = vmatpush1.msra.mxu0 0.0
      %466 = vmatprep.subr.mxu0 0.0
      %467 = vmatpush1.msra.mxu0 0.0
      %468 = vmatprep.subr.mxu0 0.0
      %469 = vmatpush1.msra.mxu0 0.0
      %470 = vmatprep.subr.mxu0 0.0
      %471 = vmatpush1.msra.mxu0 0.0
      %472 = vmatprep.subr.mxu0 0.0
      %473 = vmatpush1.msra.mxu0 0.0
      %474 = vmatprep.subr.mxu0 0.0
      %475 = vmatpush1.msra.mxu0 0.0
      %476 = vmatprep.subr.mxu0 0.0
      %477 = vmatpush1.msra.mxu0 0.0
      %478 = vmatprep.subr.mxu0 0.0
      %479 = vmatpush1.msra.mxu0 0.0
      %480 = vmatprep.subr.mxu0 0.0
      %481 = vmatpush1.msra.mxu0 0.0
      %482 = vmatprep.subr.mxu0 0.0
      %483 = vmatpush1.msra.mxu0 0.0
      %484 = vmatprep.subr.mxu0 0.0
      %485 = vmatpush1.msra.mxu0 0.0
      %486 = vmatprep.subr.mxu0 0.0
      %487 = vmatpush1.msra.mxu0 0.0
      %488 = vmatprep.subr.mxu0 0.0
      %489 = vmatpush1.msra.mxu0 0.0
      %490 = vmatprep.subr.mxu0 0.0
      %491 = vmatpush1.msra.mxu0 0.0
      %492 = vmatprep.subr.mxu0 0.0
      %493 = vmatpush1.msra.mxu0 0.0
      %494 = vmatprep.subr.mxu0 %v462
      %495 = vmatpush1.msra.mxu0 %v459
      %496 = vmatprep.subr.mxu0 0.0
      %497 = vmatpush2.msra.mxu0 0.0
      %498 = vmatprep.subr.mxu0 0.0
      %499 = vmatpush2.msra.mxu0 0.0
      %500 = vmatprep.subr.mxu0 0.0
      %501 = vmatpush2.msra.mxu0 0.0
      %502 = vmatprep.subr.mxu0 0.0
      %503 = vmatpush2.msra.mxu0 0.0
      %504 = vmatprep.subr.mxu0 0.0
      %505 = vmatpush2.msra.mxu0 0.0
      %506 = vmatprep.subr.mxu0 0.0
      %507 = vmatpush2.msra.mxu0 0.0
      %508 = vmatprep.subr.mxu0 0.0
      %509 = vmatpush2.msra.mxu0 0.0
      %510 = vmatprep.subr.mxu0 0.0
      %511 = vmatpush2.msra.mxu0 0.0
      %512 = vmatprep.subr.mxu0 0.0
      %513 = vmatpush2.msra.mxu0 0.0
      %514 = vmatprep.subr.mxu0 0.0
      %515 = vmatpush2.msra.mxu0 0.0
      %516 = vmatprep.subr.mxu0 0.0
      %517 = vmatpush2.msra.mxu0 0.0
      %518 = vmatprep.subr.mxu0 0.0
      %519 = vmatpush2.msra.mxu0 0.0
      %520 = vmatprep.subr.mxu0 0.0
      %521 = vmatpush2.msra.mxu0 0.0
      %522 = vmatprep.subr.mxu0 0.0
      %523 = vmatpush2.msra.mxu0 0.0
      %524 = vmatprep.subr.mxu0 0.0
      %525 = vmatpush2.msra.mxu0 0.0
      %526 = vmatprep.subr.mxu0 0.0
      %527 = vmatpush2.msra.mxu0 0.0
      %528 = vmatprep.mubr.f32.mxu0 0.0
      %529 = vmatmul.mubr.f32.gmra.mxu0 %v456
      %v530 = vpop.f32.mrf.mxu0
      %v531 = vadd.f32 0.0, %v530
      %v532 = vpop.f32.mrf.mxu0
      %v533 = vadd.f32 0.0, %v532
      %534 = vdwg.mxu0
      %v535 = vadd.f32 %v432, %v531
      %v536 = vadd.f32 %v434, %v533
      %537 = vrot.lane.b32.xlu0 %v228, 1
      %v538 = vpop.permute.xlu0 %537
      %539 = vrot.lane.b32.xlu0 %v237, 1
      %v540 = vpop.permute.xlu0 %539
      %vm541 = vcmp.lt.s32.totalorder %v230, 1
      %v542 = vsel %vm541, %v538, %v540
      %v543 = vsel %vm541, %v540, %v538
      %v544 = vsel %vm248, 1, 0
      %v545 = vsel %vm249, 1, 0
      %vm546 = vcmp.eq.s32.totalorder %v544, 1
      %vm547 = vcmp.eq.s32.totalorder %v545, 1
      %v548 = vsel %vm546, %v543, 0.0
      %v549 = vsel %vm547, %v542, 0.0
      %s550 = scalar_lea.vmem %s1, 24
      %v551 = vld [vmem:[%s550] sm:$0xff]
      %v553 = vsel %vm274, %v551, 0
      %v556 = vsel %vm278, %v548, 0
      %v559 = vsel %vm278, %v549, 0
      %561 = vmatprep.subr.mxu0 0.0
      %562 = vmatpush1.msra.mxu0 0.0
      %563 = vmatprep.subr.mxu0 0.0
      %564 = vmatpush1.msra.mxu0 0.0
      %565 = vmatprep.subr.mxu0 0.0
      %566 = vmatpush1.msra.mxu0 0.0
      %567 = vmatprep.subr.mxu0 0.0
      %568 = vmatpush1.msra.mxu0 0.0
      %569 = vmatprep.subr.mxu0 0.0
      %570 = vmatpush1.msra.mxu0 0.0
      %571 = vmatprep.subr.mxu0 0.0
      %572 = vmatpush1.msra.mxu0 0.0
      %573 = vmatprep.subr.mxu0 0.0
      %574 = vmatpush1.msra.mxu0 0.0
      %575 = vmatprep.subr.mxu0 0.0
      %576 = vmatpush1.msra.mxu0 0.0
      %577 = vmatprep.subr.mxu0 0.0
      %578 = vmatpush1.msra.mxu0 0.0
      %579 = vmatprep.subr.mxu0 0.0
      %580 = vmatpush1.msra.mxu0 0.0
      %581 = vmatprep.subr.mxu0 0.0
      %582 = vmatpush1.msra.mxu0 0.0
      %583 = vmatprep.subr.mxu0 0.0
      %584 = vmatpush1.msra.mxu0 0.0
      %585 = vmatprep.subr.mxu0 0.0
      %586 = vmatpush1.msra.mxu0 0.0
      %587 = vmatprep.subr.mxu0 0.0
      %588 = vmatpush1.msra.mxu0 0.0
      %589 = vmatprep.subr.mxu0 0.0
      %590 = vmatpush1.msra.mxu0 0.0
      %591 = vmatprep.subr.mxu0 %v559
      %592 = vmatpush1.msra.mxu0 %v556
      %593 = vmatprep.subr.mxu0 0.0
      %594 = vmatpush2.msra.mxu0 0.0
      %595 = vmatprep.subr.mxu0 0.0
      %596 = vmatpush2.msra.mxu0 0.0
      %597 = vmatprep.subr.mxu0 0.0
      %598 = vmatpush2.msra.mxu0 0.0
      %599 = vmatprep.subr.mxu0 0.0
      %600 = vmatpush2.msra.mxu0 0.0
      %601 = vmatprep.subr.mxu0 0.0
      %602 = vmatpush2.msra.mxu0 0.0
      %603 = vmatprep.subr.mxu0 0.0
      %604 = vmatpush2.msra.mxu0 0.0
      %605 = vmatprep.subr.mxu0 0.0
      %606 = vmatpush2.msra.mxu0 0.0
      %607 = vmatprep.subr.mxu0 0.0
      %608 = vmatpush2.msra.mxu0 0.0
      %609 = vmatprep.subr.mxu0 0.0
      %610 = vmatpush2.msra.mxu0 0.0
      %611 = vmatprep.subr.mxu0 0.0
      %612 = vmatpush2.msra.mxu0 0.0
      %613 = vmatprep.subr.mxu0 0.0
      %614 = vmatpush2.msra.mxu0 0.0
      %615 = vmatprep.subr.mxu0 0.0
      %616 = vmatpush2.msra.mxu0 0.0
      %617 = vmatprep.subr.mxu0 0.0
      %618 = vmatpush2.msra.mxu0 0.0
      %619 = vmatprep.subr.mxu0 0.0
      %620 = vmatpush2.msra.mxu0 0.0
      %621 = vmatprep.subr.mxu0 0.0
      %622 = vmatpush2.msra.mxu0 0.0
      %623 = vmatprep.subr.mxu0 0.0
      %624 = vmatpush2.msra.mxu0 0.0
      %625 = vmatprep.mubr.f32.mxu0 0.0
      %626 = vmatmul.mubr.f32.gmra.mxu0 %v553
      %v627 = vpop.f32.mrf.mxu0
      %v628 = vadd.f32 0.0, %v627
      %v629 = vpop.f32.mrf.mxu0
      %v630 = vadd.f32 0.0, %v629
      %631 = vdwg.mxu0
      %v632 = vadd.f32 %v535, %v628
      %v633 = vadd.f32 %v536, %v630
      %s634 = scalar_lea.vmem %s1, 32
      %v635 = vld [vmem:[%s634] sm:$0xff]
      %v637 = vsel %vm274, %v635, 0
      %v639 = vsel %vm278, %v228, 0
      %v641 = vsel %vm278, %v237, 0
      %643 = vmatprep.subr.mxu0 0.0
      %644 = vmatpush1.msra.mxu0 0.0
      %645 = vmatprep.subr.mxu0 0.0
      %646 = vmatpush1.msra.mxu0 0.0
      %647 = vmatprep.subr.mxu0 0.0
      %648 = vmatpush1.msra.mxu0 0.0
      %649 = vmatprep.subr.mxu0 0.0
      %650 = vmatpush1.msra.mxu0 0.0
      %651 = vmatprep.subr.mxu0 0.0
      %652 = vmatpush1.msra.mxu0 0.0
      %653 = vmatprep.subr.mxu0 0.0
      %654 = vmatpush1.msra.mxu0 0.0
      %655 = vmatprep.subr.mxu0 0.0
      %656 = vmatpush1.msra.mxu0 0.0
      %657 = vmatprep.subr.mxu0 0.0
      %658 = vmatpush1.msra.mxu0 0.0
      %659 = vmatprep.subr.mxu0 0.0
      %660 = vmatpush1.msra.mxu0 0.0
      %661 = vmatprep.subr.mxu0 0.0
      %662 = vmatpush1.msra.mxu0 0.0
      %663 = vmatprep.subr.mxu0 0.0
      %664 = vmatpush1.msra.mxu0 0.0
      %665 = vmatprep.subr.mxu0 0.0
      %666 = vmatpush1.msra.mxu0 0.0
      %667 = vmatprep.subr.mxu0 0.0
      %668 = vmatpush1.msra.mxu0 0.0
      %669 = vmatprep.subr.mxu0 0.0
      %670 = vmatpush1.msra.mxu0 0.0
      %671 = vmatprep.subr.mxu0 0.0
      %672 = vmatpush1.msra.mxu0 0.0
      %673 = vmatprep.subr.mxu0 %v641
      %674 = vmatpush1.msra.mxu0 %v639
      %675 = vmatprep.subr.mxu0 0.0
      %676 = vmatpush2.msra.mxu0 0.0
      %677 = vmatprep.subr.mxu0 0.0
      %678 = vmatpush2.msra.mxu0 0.0
      %679 = vmatprep.subr.mxu0 0.0
      %680 = vmatpush2.msra.mxu0 0.0
      %681 = vmatprep.subr.mxu0 0.0
      %682 = vmatpush2.msra.mxu0 0.0
      %683 = vmatprep.subr.mxu0 0.0
      %684 = vmatpush2.msra.mxu0 0.0
      %685 = vmatprep.subr.mxu0 0.0
      %686 = vmatpush2.msra.mxu0 0.0
      %687 = vmatprep.subr.mxu0 0.0
      %688 = vmatpush2.msra.mxu0 0.0
      %689 = vmatprep.subr.mxu0 0.0
      %690 = vmatpush2.msra.mxu0 0.0
      %691 = vmatprep.subr.mxu0 0.0
      %692 = vmatpush2.msra.mxu0 0.0
      %693 = vmatprep.subr.mxu0 0.0
      %694 = vmatpush2.msra.mxu0 0.0
      %695 = vmatprep.subr.mxu0 0.0
      %696 = vmatpush2.msra.mxu0 0.0
      %697 = vmatprep.subr.mxu0 0.0
      %698 = vmatpush2.msra.mxu0 0.0
      %699 = vmatprep.subr.mxu0 0.0
      %700 = vmatpush2.msra.mxu0 0.0
      %701 = vmatprep.subr.mxu0 0.0
      %702 = vmatpush2.msra.mxu0 0.0
      %703 = vmatprep.subr.mxu0 0.0
      %704 = vmatpush2.msra.mxu0 0.0
      %705 = vmatprep.subr.mxu0 0.0
      %706 = vmatpush2.msra.mxu0 0.0
      %707 = vmatprep.mubr.f32.mxu0 0.0
      %708 = vmatmul.mubr.f32.gmra.mxu0 %v637
      %v709 = vpop.f32.mrf.mxu0
      %v710 = vadd.f32 0.0, %v709
      %v711 = vpop.f32.mrf.mxu0
      %v712 = vadd.f32 0.0, %v711
      %713 = vdwg.mxu0
      %v714 = vadd.f32 %v632, %v710
      %v715 = vadd.f32 %v633, %v712
      %716 = vrot.lane.b32.xlu0 %v228, 127
      %v717 = vpop.permute.xlu0 %716
      %718 = vrot.lane.b32.xlu0 %v237, 127
      %v719 = vpop.permute.xlu0 %718
      %vm720 = vcmp.lt.s32.totalorder %v230, 127
      %v721 = vsel %vm720, %v717, %v719
      %v722 = vsel %vm720, %v719, %v717
      %v723 = vsel %vm443, 1, 0
      %v724 = vsel %vm444, 1, 0
      %vm725 = vcmp.eq.s32.totalorder %v723, 1
      %vm726 = vcmp.eq.s32.totalorder %v724, 1
      %v727 = vsel %vm725, %v721, 0.0
      %v728 = vsel %vm726, %v722, 0.0
      %s729 = scalar_lea.vmem %s1, 40
      %v730 = vld [vmem:[%s729] sm:$0xff]
      %v732 = vsel %vm274, %v730, 0
      %v735 = vsel %vm278, %v727, 0
      %v738 = vsel %vm278, %v728, 0
      %740 = vmatprep.subr.mxu0 0.0
      %741 = vmatpush1.msra.mxu0 0.0
      %742 = vmatprep.subr.mxu0 0.0
      %743 = vmatpush1.msra.mxu0 0.0
      %744 = vmatprep.subr.mxu0 0.0
      %745 = vmatpush1.msra.mxu0 0.0
      %746 = vmatprep.subr.mxu0 0.0
      %747 = vmatpush1.msra.mxu0 0.0
      %748 = vmatprep.subr.mxu0 0.0
      %749 = vmatpush1.msra.mxu0 0.0
      %750 = vmatprep.subr.mxu0 0.0
      %751 = vmatpush1.msra.mxu0 0.0
      %752 = vmatprep.subr.mxu0 0.0
      %753 = vmatpush1.msra.mxu0 0.0
      %754 = vmatprep.subr.mxu0 0.0
      %755 = vmatpush1.msra.mxu0 0.0
      %756 = vmatprep.subr.mxu0 0.0
      %757 = vmatpush1.msra.mxu0 0.0
      %758 = vmatprep.subr.mxu0 0.0
      %759 = vmatpush1.msra.mxu0 0.0
      %760 = vmatprep.subr.mxu0 0.0
      %761 = vmatpush1.msra.mxu0 0.0
      %762 = vmatprep.subr.mxu0 0.0
      %763 = vmatpush1.msra.mxu0 0.0
      %764 = vmatprep.subr.mxu0 0.0
      %765 = vmatpush1.msra.mxu0 0.0
      %766 = vmatprep.subr.mxu0 0.0
      %767 = vmatpush1.msra.mxu0 0.0
      %768 = vmatprep.subr.mxu0 0.0
      %769 = vmatpush1.msra.mxu0 0.0
      %770 = vmatprep.subr.mxu0 %v738
      %771 = vmatpush1.msra.mxu0 %v735
      %772 = vmatprep.subr.mxu0 0.0
      %773 = vmatpush2.msra.mxu0 0.0
      %774 = vmatprep.subr.mxu0 0.0
      %775 = vmatpush2.msra.mxu0 0.0
      %776 = vmatprep.subr.mxu0 0.0
      %777 = vmatpush2.msra.mxu0 0.0
      %778 = vmatprep.subr.mxu0 0.0
      %779 = vmatpush2.msra.mxu0 0.0
      %780 = vmatprep.subr.mxu0 0.0
      %781 = vmatpush2.msra.mxu0 0.0
      %782 = vmatprep.subr.mxu0 0.0
      %783 = vmatpush2.msra.mxu0 0.0
      %784 = vmatprep.subr.mxu0 0.0
      %785 = vmatpush2.msra.mxu0 0.0
      %786 = vmatprep.subr.mxu0 0.0
      %787 = vmatpush2.msra.mxu0 0.0
      %788 = vmatprep.subr.mxu0 0.0
      %789 = vmatpush2.msra.mxu0 0.0
      %790 = vmatprep.subr.mxu0 0.0
      %791 = vmatpush2.msra.mxu0 0.0
      %792 = vmatprep.subr.mxu0 0.0
      %793 = vmatpush2.msra.mxu0 0.0
      %794 = vmatprep.subr.mxu0 0.0
      %795 = vmatpush2.msra.mxu0 0.0
      %796 = vmatprep.subr.mxu0 0.0
      %797 = vmatpush2.msra.mxu0 0.0
      %798 = vmatprep.subr.mxu0 0.0
      %799 = vmatpush2.msra.mxu0 0.0
      %800 = vmatprep.subr.mxu0 0.0
      %801 = vmatpush2.msra.mxu0 0.0
      %802 = vmatprep.subr.mxu0 0.0
      %803 = vmatpush2.msra.mxu0 0.0
      %804 = vmatprep.mubr.f32.mxu0 0.0
      %805 = vmatmul.mubr.f32.gmra.mxu0 %v732
      %v806 = vpop.f32.mrf.mxu0
      %v807 = vadd.f32 0.0, %v806
      %v808 = vpop.f32.mrf.mxu0
      %v809 = vadd.f32 0.0, %v808
      %810 = vdwg.mxu0
      %v811 = vadd.f32 %v714, %v807
      %v812 = vadd.f32 %v715, %v809
      %813 = vrot.lane.b32.xlu0 %v228, 113
      %v814 = vpop.permute.xlu0 %813
      %815 = vrot.lane.b32.xlu0 %v237, 113
      %v816 = vpop.permute.xlu0 %815
      %vm817 = vcmp.lt.s32.totalorder %v230, 113
      %v818 = vsel %vm817, %v814, %v816
      %v819 = vsel %vm817, %v816, %v814
      %vm820 = vcmp.lt.s32.totalorder %v232, 240
      %vm821 = vcmp.lt.s32.totalorder %v233, 240
      %vm822 = vmand %vm820, %vm248
      %vm823 = vmand %vm821, %vm249
      %v824 = vsel %vm822, 1, 0
      %v825 = vsel %vm823, 1, 0
      %vm826 = vcmp.eq.s32.totalorder %v824, 1
      %vm827 = vcmp.eq.s32.totalorder %v825, 1
      %v828 = vsel %vm826, %v818, 0.0
      %v829 = vsel %vm827, %v819, 0.0
      %s830 = scalar_lea.vmem %s1, 48
      %v831 = vld [vmem:[%s830] sm:$0xff]
      %v833 = vsel %vm274, %v831, 0
      %v836 = vsel %vm278, %v828, 0
      %v839 = vsel %vm278, %v829, 0
      %841 = vmatprep.subr.mxu0 0.0
      %842 = vmatpush1.msra.mxu0 0.0
      %843 = vmatprep.subr.mxu0 0.0
      %844 = vmatpush1.msra.mxu0 0.0
      %845 = vmatprep.subr.mxu0 0.0
      %846 = vmatpush1.msra.mxu0 0.0
      %847 = vmatprep.subr.mxu0 0.0
      %848 = vmatpush1.msra.mxu0 0.0
      %849 = vmatprep.subr.mxu0 0.0
      %850 = vmatpush1.msra.mxu0 0.0
      %851 = vmatprep.subr.mxu0 0.0
      %852 = vmatpush1.msra.mxu0 0.0
      %853 = vmatprep.subr.mxu0 0.0
      %854 = vmatpush1.msra.mxu0 0.0
      %855 = vmatprep.subr.mxu0 0.0
      %856 = vmatpush1.msra.mxu0 0.0
      %857 = vmatprep.subr.mxu0 0.0
      %858 = vmatpush1.msra.mxu0 0.0
      %859 = vmatprep.subr.mxu0 0.0
      %860 = vmatpush1.msra.mxu0 0.0
      %861 = vmatprep.subr.mxu0 0.0
      %862 = vmatpush1.msra.mxu0 0.0
      %863 = vmatprep.subr.mxu0 0.0
      %864 = vmatpush1.msra.mxu0 0.0
      %865 = vmatprep.subr.mxu0 0.0
      %866 = vmatpush1.msra.mxu0 0.0
      %867 = vmatprep.subr.mxu0 0.0
      %868 = vmatpush1.msra.mxu0 0.0
      %869 = vmatprep.subr.mxu0 0.0
      %870 = vmatpush1.msra.mxu0 0.0
      %871 = vmatprep.subr.mxu0 %v839
      %872 = vmatpush1.msra.mxu0 %v836
      %873 = vmatprep.subr.mxu0 0.0
      %874 = vmatpush2.msra.mxu0 0.0
      %875 = vmatprep.subr.mxu0 0.0
      %876 = vmatpush2.msra.mxu0 0.0
      %877 = vmatprep.subr.mxu0 0.0
      %878 = vmatpush2.msra.mxu0 0.0
      %879 = vmatprep.subr.mxu0 0.0
      %880 = vmatpush2.msra.mxu0 0.0
      %881 = vmatprep.subr.mxu0 0.0
      %882 = vmatpush2.msra.mxu0 0.0
      %883 = vmatprep.subr.mxu0 0.0
      %884 = vmatpush2.msra.mxu0 0.0
      %885 = vmatprep.subr.mxu0 0.0
      %886 = vmatpush2.msra.mxu0 0.0
      %887 = vmatprep.subr.mxu0 0.0
      %888 = vmatpush2.msra.mxu0 0.0
      %889 = vmatprep.subr.mxu0 0.0
      %890 = vmatpush2.msra.mxu0 0.0
      %891 = vmatprep.subr.mxu0 0.0
      %892 = vmatpush2.msra.mxu0 0.0
      %893 = vmatprep.subr.mxu0 0.0
      %894 = vmatpush2.msra.mxu0 0.0
      %895 = vmatprep.subr.mxu0 0.0
      %896 = vmatpush2.msra.mxu0 0.0
      %897 = vmatprep.subr.mxu0 0.0
      %898 = vmatpush2.msra.mxu0 0.0
      %899 = vmatprep.subr.mxu0 0.0
      %900 = vmatpush2.msra.mxu0 0.0
      %901 = vmatprep.subr.mxu0 0.0
      %902 = vmatpush2.msra.mxu0 0.0
      %903 = vmatprep.subr.mxu0 0.0
      %904 = vmatpush2.msra.mxu0 0.0
      %905 = vmatprep.mubr.f32.mxu0 0.0
      %906 = vmatmul.mubr.f32.gmra.mxu0 %v833
      %v907 = vpop.f32.mrf.mxu0
      %v908 = vadd.f32 0.0, %v907
      %v909 = vpop.f32.mrf.mxu0
      %v910 = vadd.f32 0.0, %v909
      %911 = vdwg.mxu0
      %v912 = vadd.f32 %v811, %v908
      %v913 = vadd.f32 %v812, %v910
      %914 = vrot.lane.b32.xlu0 %v228, 112
      %v915 = vpop.permute.xlu0 %914
      %916 = vrot.lane.b32.xlu0 %v237, 112
      %v917 = vpop.permute.xlu0 %916
      %vm918 = vcmp.lt.s32.totalorder %v230, 112
      %v919 = vsel %vm918, %v915, %v917
      %v920 = vsel %vm918, %v917, %v915
      %v921 = vsel %vm820, 1, 0
      %v922 = vsel %vm821, 1, 0
      %vm923 = vcmp.eq.s32.totalorder %v921, 1
      %vm924 = vcmp.eq.s32.totalorder %v922, 1
      %v925 = vsel %vm923, %v919, 0.0
      %v926 = vsel %vm924, %v920, 0.0
      %s927 = scalar_lea.vmem %s1, 56
      %v928 = vld [vmem:[%s927] sm:$0xff]
      %v930 = vsel %vm274, %v928, 0
      %v933 = vsel %vm278, %v925, 0
      %v936 = vsel %vm278, %v926, 0
      %938 = vmatprep.subr.mxu0 0.0
      %939 = vmatpush1.msra.mxu0 0.0
      %940 = vmatprep.subr.mxu0 0.0
      %941 = vmatpush1.msra.mxu0 0.0
      %942 = vmatprep.subr.mxu0 0.0
      %943 = vmatpush1.msra.mxu0 0.0
      %944 = vmatprep.subr.mxu0 0.0
      %945 = vmatpush1.msra.mxu0 0.0
      %946 = vmatprep.subr.mxu0 0.0
      %947 = vmatpush1.msra.mxu0 0.0
      %948 = vmatprep.subr.mxu0 0.0
      %949 = vmatpush1.msra.mxu0 0.0
      %950 = vmatprep.subr.mxu0 0.0
      %951 = vmatpush1.msra.mxu0 0.0
      %952 = vmatprep.subr.mxu0 0.0
      %953 = vmatpush1.msra.mxu0 0.0
      %954 = vmatprep.subr.mxu0 0.0
      %955 = vmatpush1.msra.mxu0 0.0
      %956 = vmatprep.subr.mxu0 0.0
      %957 = vmatpush1.msra.mxu0 0.0
      %958 = vmatprep.subr.mxu0 0.0
      %959 = vmatpush1.msra.mxu0 0.0
      %960 = vmatprep.subr.mxu0 0.0
      %961 = vmatpush1.msra.mxu0 0.0
      %962 = vmatprep.subr.mxu0 0.0
      %963 = vmatpush1.msra.mxu0 0.0
      %964 = vmatprep.subr.mxu0 0.0
      %965 = vmatpush1.msra.mxu0 0.0
      %966 = vmatprep.subr.mxu0 0.0
      %967 = vmatpush1.msra.mxu0 0.0
      %968 = vmatprep.subr.mxu0 %v936
      %969 = vmatpush1.msra.mxu0 %v933
      %970 = vmatprep.subr.mxu0 0.0
      %971 = vmatpush2.msra.mxu0 0.0
      %972 = vmatprep.subr.mxu0 0.0
      %973 = vmatpush2.msra.mxu0 0.0
      %974 = vmatprep.subr.mxu0 0.0
      %975 = vmatpush2.msra.mxu0 0.0
      %976 = vmatprep.subr.mxu0 0.0
      %977 = vmatpush2.msra.mxu0 0.0
      %978 = vmatprep.subr.mxu0 0.0
      %979 = vmatpush2.msra.mxu0 0.0
      %980 = vmatprep.subr.mxu0 0.0
      %981 = vmatpush2.msra.mxu0 0.0
      %982 = vmatprep.subr.mxu0 0.0
      %983 = vmatpush2.msra.mxu0 0.0
      %984 = vmatprep.subr.mxu0 0.0
      %985 = vmatpush2.msra.mxu0 0.0
      %986 = vmatprep.subr.mxu0 0.0
      %987 = vmatpush2.msra.mxu0 0.0
      %988 = vmatprep.subr.mxu0 0.0
      %989 = vmatpush2.msra.mxu0 0.0
      %990 = vmatprep.subr.mxu0 0.0
      %991 = vmatpush2.msra.mxu0 0.0
      %992 = vmatprep.subr.mxu0 0.0
      %993 = vmatpush2.msra.mxu0 0.0
      %994 = vmatprep.subr.mxu0 0.0
      %995 = vmatpush2.msra.mxu0 0.0
      %996 = vmatprep.subr.mxu0 0.0
      %997 = vmatpush2.msra.mxu0 0.0
      %998 = vmatprep.subr.mxu0 0.0
      %999 = vmatpush2.msra.mxu0 0.0
      %1000 = vmatprep.subr.mxu0 0.0
      %1001 = vmatpush2.msra.mxu0 0.0
      %1002 = vmatprep.mubr.f32.mxu0 0.0
      %1003 = vmatmul.mubr.f32.gmra.mxu0 %v930
      %v1004 = vpop.f32.mrf.mxu0
      %v1005 = vadd.f32 0.0, %v1004
      %v1006 = vpop.f32.mrf.mxu0
      %v1007 = vadd.f32 0.0, %v1006
      %1008 = vdwg.mxu0
      %v1009 = vadd.f32 %v912, %v1005
      %v1010 = vadd.f32 %v913, %v1007
      %1011 = vrot.lane.b32.xlu0 %v228, 111
      %v1012 = vpop.permute.xlu0 %1011
      %1013 = vrot.lane.b32.xlu0 %v237, 111
      %v1014 = vpop.permute.xlu0 %1013
      %vm1015 = vcmp.lt.s32.totalorder %v230, 111
      %v1016 = vsel %vm1015, %v1012, %v1014
      %v1017 = vsel %vm1015, %v1014, %v1012
      %vm1018 = vmand %vm820, %vm443
      %vm1019 = vmand %vm821, %vm444
      %v1020 = vsel %vm1018, 1, 0
      %v1021 = vsel %vm1019, 1, 0
      %vm1022 = vcmp.eq.s32.totalorder %v1020, 1
      %vm1023 = vcmp.eq.s32.totalorder %v1021, 1
      %v1024 = vsel %vm1022, %v1016, 0.0
      %v1025 = vsel %vm1023, %v1017, 0.0
      %s1026 = scalar_lea.vmem %s1, 64
      %v1027 = vld [vmem:[%s1026] sm:$0xff]
      %v1029 = vsel %vm274, %v1027, 0
      %v1032 = vsel %vm278, %v1024, 0
      %v1035 = vsel %vm278, %v1025, 0
      %1037 = vmatprep.subr.mxu0 0.0
      %1038 = vmatpush1.msra.mxu0 0.0
      %1039 = vmatprep.subr.mxu0 0.0
      %1040 = vmatpush1.msra.mxu0 0.0
      %1041 = vmatprep.subr.mxu0 0.0
      %1042 = vmatpush1.msra.mxu0 0.0
      %1043 = vmatprep.subr.mxu0 0.0
      %1044 = vmatpush1.msra.mxu0 0.0
      %1045 = vmatprep.subr.mxu0 0.0
      %1046 = vmatpush1.msra.mxu0 0.0
      %1047 = vmatprep.subr.mxu0 0.0
      %1048 = vmatpush1.msra.mxu0 0.0
      %1049 = vmatprep.subr.mxu0 0.0
      %1050 = vmatpush1.msra.mxu0 0.0
      %1051 = vmatprep.subr.mxu0 0.0
      %1052 = vmatpush1.msra.mxu0 0.0
      %1053 = vmatprep.subr.mxu0 0.0
      %1054 = vmatpush1.msra.mxu0 0.0
      %1055 = vmatprep.subr.mxu0 0.0
      %1056 = vmatpush1.msra.mxu0 0.0
      %1057 = vmatprep.subr.mxu0 0.0
      %1058 = vmatpush1.msra.mxu0 0.0
      %1059 = vmatprep.subr.mxu0 0.0
      %1060 = vmatpush1.msra.mxu0 0.0
      %1061 = vmatprep.subr.mxu0 0.0
      %1062 = vmatpush1.msra.mxu0 0.0
      %1063 = vmatprep.subr.mxu0 0.0
      %1064 = vmatpush1.msra.mxu0 0.0
      %1065 = vmatprep.subr.mxu0 0.0
      %1066 = vmatpush1.msra.mxu0 0.0
      %1067 = vmatprep.subr.mxu0 %v1035
      %1068 = vmatpush1.msra.mxu0 %v1032
      %1069 = vmatprep.subr.mxu0 0.0
      %1070 = vmatpush2.msra.mxu0 0.0
      %1071 = vmatprep.subr.mxu0 0.0
      %1072 = vmatpush2.msra.mxu0 0.0
      %1073 = vmatprep.subr.mxu0 0.0
      %1074 = vmatpush2.msra.mxu0 0.0
      %1075 = vmatprep.subr.mxu0 0.0
      %1076 = vmatpush2.msra.mxu0 0.0
      %1077 = vmatprep.subr.mxu0 0.0
      %1078 = vmatpush2.msra.mxu0 0.0
      %1079 = vmatprep.subr.mxu0 0.0
      %1080 = vmatpush2.msra.mxu0 0.0
      %1081 = vmatprep.subr.mxu0 0.0
      %1082 = vmatpush2.msra.mxu0 0.0
      %1083 = vmatprep.subr.mxu0 0.0
      %1084 = vmatpush2.msra.mxu0 0.0
      %1085 = vmatprep.subr.mxu0 0.0
      %1086 = vmatpush2.msra.mxu0 0.0
      %1087 = vmatprep.subr.mxu0 0.0
      %1088 = vmatpush2.msra.mxu0 0.0
      %1089 = vmatprep.subr.mxu0 0.0
      %1090 = vmatpush2.msra.mxu0 0.0
      %1091 = vmatprep.subr.mxu0 0.0
      %1092 = vmatpush2.msra.mxu0 0.0
      %1093 = vmatprep.subr.mxu0 0.0
      %1094 = vmatpush2.msra.mxu0 0.0
      %1095 = vmatprep.subr.mxu0 0.0
      %1096 = vmatpush2.msra.mxu0 0.0
      %1097 = vmatprep.subr.mxu0 0.0
      %1098 = vmatpush2.msra.mxu0 0.0
      %1099 = vmatprep.subr.mxu0 0.0
      %1100 = vmatpush2.msra.mxu0 0.0
      %1101 = vmatprep.mubr.f32.mxu0 0.0
      %1102 = vmatmul.mubr.f32.gmra.mxu0 %v1029
      %v1103 = vpop.f32.mrf.mxu0
      %v1104 = vadd.f32 0.0, %v1103
      %v1105 = vpop.f32.mrf.mxu0
      %v1106 = vadd.f32 0.0, %v1105
      %1107 = vdwg.mxu0
      %v1108 = vadd.f32 %v1009, %v1104
      %v1109 = vadd.f32 %v1010, %v1106
      %v1110 = vld [vmem:[%s2] sm:$0xff]
      %1112 = vset.pattern.permute.xlu0 0
      %1113 = vperm.xlu0 %1112, %v1110
      %v1114 = vpop.permute.xlu0 %1113
      %v1116 = vadd.f32 %v1108, %v1114
      %v1117 = vadd.f32 %v1109, %v1114
      %v1118 = vmax.f32 %v1116, 0.0
      %v1119 = vmax.f32 %v1117, 0.0
      %v1120 = vld [vmem:[%s3] sm:$0xff]
      %v1121 = vld [vmem:[%s4] sm:$0xff]
      %1123 = vset.pattern.permute.xlu0 0
      %1124 = vperm.xlu0 %1123, %v1121
      %v1125 = vpop.permute.xlu0 %1124
      %vm1127 = vcmask 64512
      %v1129 = vsel %vm1127, %v1120, 0
      %1131 = vmatprep.subr.mxu0 0.0
      %1132 = vmatpush1.msra.mxu0 0.0
      %1133 = vmatprep.subr.mxu0 0.0
      %1134 = vmatpush1.msra.mxu0 0.0
      %1135 = vmatprep.subr.mxu0 0.0
      %1136 = vmatpush1.msra.mxu0 0.0
      %1137 = vmatprep.subr.mxu0 0.0
      %1138 = vmatpush1.msra.mxu0 0.0
      %1139 = vmatprep.subr.mxu0 0.0
      %1140 = vmatpush1.msra.mxu0 0.0
      %1141 = vmatprep.subr.mxu0 0.0
      %1142 = vmatpush1.msra.mxu0 0.0
      %1143 = vmatprep.subr.mxu0 0.0
      %1144 = vmatpush1.msra.mxu0 0.0
      %1145 = vmatprep.subr.mxu0 0.0
      %1146 = vmatpush1.msra.mxu0 0.0
      %1147 = vmatprep.subr.mxu0 0.0
      %1148 = vmatpush1.msra.mxu0 0.0
      %1149 = vmatprep.subr.mxu0 0.0
      %1150 = vmatpush1.msra.mxu0 0.0
      %1151 = vmatprep.subr.mxu0 0.0
      %1152 = vmatpush1.msra.mxu0 0.0
      %1153 = vmatprep.subr.mxu0 0.0
      %1154 = vmatpush1.msra.mxu0 0.0
      %1155 = vmatprep.subr.mxu0 0.0
      %1156 = vmatpush1.msra.mxu0 0.0
      %1157 = vmatprep.subr.mxu0 0.0
      %1158 = vmatpush1.msra.mxu0 0.0
      %1159 = vmatprep.subr.mxu0 0.0
      %1160 = vmatpush1.msra.mxu0 0.0
      %1161 = vmatprep.subr.mxu0 %v1119
      %1162 = vmatpush1.msra.mxu0 %v1118
      %1163 = vmatprep.subr.mxu0 0.0
      %1164 = vmatpush2.msra.mxu0 0.0
      %1165 = vmatprep.subr.mxu0 0.0
      %1166 = vmatpush2.msra.mxu0 0.0
      %1167 = vmatprep.subr.mxu0 0.0
      %1168 = vmatpush2.msra.mxu0 0.0
      %1169 = vmatprep.subr.mxu0 0.0
      %1170 = vmatpush2.msra.mxu0 0.0
      %1171 = vmatprep.subr.mxu0 0.0
      %1172 = vmatpush2.msra.mxu0 0.0
      %1173 = vmatprep.subr.mxu0 0.0
      %1174 = vmatpush2.msra.mxu0 0.0
      %1175 = vmatprep.subr.mxu0 0.0
      %1176 = vmatpush2.msra.mxu0 0.0
      %1177 = vmatprep.subr.mxu0 0.0
      %1178 = vmatpush2.msra.mxu0 0.0
      %1179 = vmatprep.subr.mxu0 0.0
      %1180 = vmatpush2.msra.mxu0 0.0
      %1181 = vmatprep.subr.mxu0 0.0
      %1182 = vmatpush2.msra.mxu0 0.0
      %1183 = vmatprep.subr.mxu0 0.0
      %1184 = vmatpush2.msra.mxu0 0.0
      %1185 = vmatprep.subr.mxu0 0.0
      %1186 = vmatpush2.msra.mxu0 0.0
      %1187 = vmatprep.subr.mxu0 0.0
      %1188 = vmatpush2.msra.mxu0 0.0
      %1189 = vmatprep.subr.mxu0 0.0
      %1190 = vmatpush2.msra.mxu0 0.0
      %1191 = vmatprep.subr.mxu0 0.0
      %1192 = vmatpush2.msra.mxu0 0.0
      %1193 = vmatprep.subr.mxu0 0.0
      %1194 = vmatpush2.msra.mxu0 0.0
      %1195 = vmatprep.mubr.f32.mxu0 0.0
      %1196 = vmatmul.mubr.f32.gmra.mxu0 %v1129
      %v1197 = vpop.f32.mrf.mxu0
      %v1198 = vadd.f32 %v1125, %v1197
      %v1199 = vpop.f32.mrf.mxu0
      %v1200 = vadd.f32 %v1125, %v1199
      %1201 = vdwg.mxu0
      %1202 = vst [vmem:[%s226] sm:$0xff] %v1198
      %1203 = vst [vmem:[%s226 + $0x8] sm:$0xff] %v1200
      %s1204 = smul.u32 2, %s16
      %p1205 = scmp.lt.s32.totalorder %s1204, 3
      %s1206 = scalar_select %p1205, %s1204, 3
      %s1207 = smul.addr %s1206, 8
      %s1208 = scalar_lea.vmem %s5, %s1207
      // Predicated region
      $region41: #{multi_output_net.1} parent=39 // pred_check
        %p1209 = pneg %p144
      $region42: #{multi_output_net.1} parent=39 // pred_check_branch
        %1211 = sbr.rel (%p1209) target = $region44
      $region43: #{multi_output_net.1} parent=39 // pred_region
        %s1212 = smul.u32 2, %s16
      $region44: #{multi_output_net.1} parent=39 // pred_fallthru
        _
    $region40: #{multi_output_net.1} parent=5 // pred_fallthru
      _
    %p1213 = scmp.le.s32.totalorder 2, %s11
    // Predicated region
    $region45: #{multi_output_net.1} parent=5 // pred_check
      %p1214 = pneg %p1213
    $region46: #{multi_output_net.1} parent=5 // pred_check_branch
      %1216 = sbr.rel (%p1214) target = $region48
    $region47: #{multi_output_net.1} parent=5 // pred_region
      %s1217 = ssub.s32 %s11, 2
      // Predicated region
      $region49: #{multi_output_net.1} parent=47 // pred_check
        %p1218 = pneg %p150
      $region50: #{multi_output_net.1} parent=47 // pred_check_branch
        %1220 = sbr.rel (%p1218) target = $region52
      $region51: #{multi_output_net.1} parent=47 // pred_region
        %s1221 = smul.u32 2, %s17
        %p1222 = scmp.lt.s32.totalorder %s1221, 3
        %s1223 = scalar_select %p1222, %s1221, 3
        %s1224 = smul.addr %s1223, 8
        %s1225 = scalar_lea.vmem %s5, %s1224
      $region52: #{multi_output_net.1} parent=47 // pred_fallthru
        _
    $region48: #{multi_output_net.1} parent=5 // pred_fallthru
      _
  $region6: #{multi_output_net.1} parent=0 // loop_footer
    %s15 = sadd.s32 1, %s11
  $region7: #{multi_output_net.1} parent=0 // loop_footer_branch
    %10 = sbr.rel target = $region3
  $region8: #{multi_output_net.1} parent=0 // loop_exit
    _

</llo_original>
